<compile_context>
chip_gen: v5e
topology: v5e:2x2
jax: 0.10.0
libtpu: 0.0.40
codegen_flags: <defaults>
</compile_context>

<pallas_src>
import math

import jax
import jax.numpy as jnp
from jax import lax
from jax.experimental import pallas as pl
from jax.experimental.pallas import tpu as pltpu


# --------------------------- tile-size planning ----------------------------- #

_LANE = 128
_VMEM_TILE_BUDGET = 28 * 1024 * 1024   # working-set budget, safe on v5e/v6e/v7x
_VMEM_LIMIT_BYTES = 40 * 1024 * 1024   # scoped VMEM limit handed to Mosaic


def _round_up(v, m):
    return -(-v // m) * m


def _cap_for_two_cores(tm, M):
    # Guarantee >= 2 grid steps when the batch is big enough so that
    # dimension_semantics=("parallel",) can shard M across v7x's two
    # TensorCores.  No-op on single-TC v5e/v6e.
    if M > 16:
        tm = min(tm, _round_up(-(-M // 2), 8))
    return tm


def _full_d_vmem_bytes(tm, D):
    # x double-buffer + lane-padded out double-buffer + resident weight + bias
    return 4 * (2 * tm * D + 2 * tm * _LANE + 8 * D + 8 * _LANE)


def _ktiled_vmem_bytes(tm, tk):
    # x dbl-buf + w dbl-buf + out dbl-buf + f32 accumulator + bias
    return 4 * (2 * tm * tk + 2 * 8 * tk + 2 * tm * _LANE + tm * _LANE + 8 * _LANE)


def _largest_divisor_leq(n, cap):
    best = 1
    i = 1
    while i * i <= n:
        if n % i == 0:
            for d in (i, n // i):
                if best < d <= cap:
                    best = d
        i += 1
    return best


def _plan_tiles(M, D):
    """Return (tm, tk); tk == D means no K tiling."""
    budget = _VMEM_TILE_BUDGET
    if M <= 16:
        tm = M                                    # single / tiny tile, full-M block
    else:
        per_row = 4 * (2 * D + 2 * _LANE)         # x dbl-buf row + out dbl-buf row
        tm = max(512, min(budget // max(per_row, 1), 8192))
        tm = _cap_for_two_cores(tm, M)
        tm = max(8, (tm // 8) * 8)
    # Shrink tm until full-D blocks fit the budget.
    while tm > 8 and _full_d_vmem_bytes(tm, D) > budget:
        tm = max(8, (tm // 2 // 8) * 8)
    if _full_d_vmem_bytes(tm, D) <= budget or D % _LANE != 0:
        # TODO(synk): for huge non-128-aligned input_dim, zero-pad D to enable
        # K-tiling; here we keep full-D blocks (correct, may exceed the soft
        # VMEM budget only in that extreme corner).
        return tm, D

    # K-tiled path: full-D blocks don't fit even at tm == 8.
    if M <= 16:
        tm_k = M
    else:
        tm_k = max(8, (_cap_for_two_cores(512, M) // 8) * 8)
    # Largest tk (multiple of 128 dividing D) that fits the budget.
    fixed = 2 * tm_k * _LANE + tm_k * _LANE + 8 * _LANE
    tk_units_cap = max(1, ((budget // 4 - fixed) // (2 * tm_k + 16)) // _LANE)
    tk = _LANE * _largest_divisor_leq(D // _LANE, tk_units_cap)
    while tm_k > 8 and _ktiled_vmem_bytes(tm_k, tk) > budget:
        tm_k = max(8, (tm_k // 2 // 8) * 8)
    return tm_k, tk


# ------------------------------ Pallas kernels ------------------------------ #

def _fc_kernel(x_ref, w_ref, b_ref, o_ref):
    # x_ref: (tm, D); w_ref: (N, D) PyTorch layout; b_ref: (1, N); o_ref: (tm, N)
    o_ref[...] = lax.dot_general(
        x_ref[...], w_ref[...],
        dimension_numbers=(((1,), (1,)), ((), ())),   # contract D with D (no transpose op)
        preferred_element_type=jnp.float32,
    ) + b_ref[...]


def _fc_kernel_ktiled(x_ref, w_ref, b_ref, o_ref, acc_ref):
    # x_ref: (tm, tk); w_ref: (N, tk); b_ref: (1, N); o_ref: (tm, N); acc: (tm, N) f32
    k = pl.program_id(1)

    @pl.when(k == 0)
    def _():
        acc_ref[...] = jnp.zeros_like(acc_ref)

    acc_ref[...] += lax.dot_general(
        x_ref[...], w_ref[...],
        dimension_numbers=(((1,), (1,)), ((), ())),
        preferred_element_type=jnp.float32,
    )

    @pl.when(k == pl.num_programs(1) - 1)
    def _():
        o_ref[...] = acc_ref[...] + b_ref[...]


# --------------------------------- wrapper ---------------------------------- #

def fc_forward(x, w, b):
    """Linear layer: x (..., D) f32, w (N, D) (PyTorch layout), b (N,)."""
    *lead, D = x.shape
    M = math.prod(lead) if lead else 1
    x2 = x.reshape(M, D)                 # fold all batch dims into the matmul M axis
    N = w.shape[0]
    b2 = b.reshape(1, N)

    tm, tk = _plan_tiles(M, D)
    grid_m = pl.cdiv(M, tm)              # ragged final block handled by Pallas (no pad)

    cost = pl.CostEstimate(
        flops=2 * M * D * N,
        transcendentals=0,
        bytes_accessed=4 * (M * D + D * N + M * N),
    )

    if tk == D:
        out = pl.pallas_call(
            _fc_kernel,
            out_shape=jax.ShapeDtypeStruct((M, N), jnp.float32),
            grid=(grid_m,),
            in_specs=[
                pl.BlockSpec((tm, D), lambda i: (i, 0)),   # activations, tiled on M
                pl.BlockSpec((N, D), lambda i: (0, 0)),    # weight, resident in VMEM
                pl.BlockSpec((1, N), lambda i: (0, 0)),    # bias, resident in VMEM
            ],
            out_specs=pl.BlockSpec((tm, N), lambda i: (i, 0)),
            compiler_params=pltpu.CompilerParams(
                dimension_semantics=("parallel",),
                vmem_limit_bytes=_VMEM_LIMIT_BYTES),
            cost_estimate=cost,
        )(x2, w, b2)
    else:
        grid_k = D // tk                 # tk always divides D by construction
        out = pl.pallas_call(
            _fc_kernel_ktiled,
            out_shape=jax.ShapeDtypeStruct((M, N), jnp.float32),
            grid=(grid_m, grid_k),
            in_specs=[
                pl.BlockSpec((tm, tk), lambda i, k: (i, k)),
                pl.BlockSpec((N, tk), lambda i, k: (0, k)),
                pl.BlockSpec((1, N), lambda i, k: (0, 0)),
            ],
            out_specs=pl.BlockSpec((tm, N), lambda i, k: (i, 0)),
            scratch_shapes=[pltpu.VMEM((tm, N), jnp.float32)],
            compiler_params=pltpu.CompilerParams(
                dimension_semantics=("parallel", "arbitrary"),
                vmem_limit_bytes=_VMEM_LIMIT_BYTES),
            cost_estimate=cost,
        )(x2, w, b2)

    return out.reshape(*lead, N)


# -------------------------------- parameters -------------------------------- #

def init_fc_params(key, input_dim, out_dim=3):
    kw, kb = jax.random.split(key)
    bound = 1.0 / math.sqrt(input_dim)        # PyTorch nn.Linear default init
    w = jax.random.uniform(kw, (out_dim, input_dim), jnp.float32, -bound, bound)
    b = jax.random.uniform(kb, (out_dim,), jnp.float32, -bound, bound)
    return w, b


# ----------------------------------- main ------------------------------------ #

if __name__ == "__main__":
    key = jax.random.PRNGKey(0)
    kp, kx, kx2 = jax.random.split(key, 3)

    B, INPUT_DIM, OUT = 2, 32, 3
    w, b = init_fc_params(kp, INPUT_DIM, OUT)
    fwd = jax.jit(fc_forward)

    # spec-shaped input: (batch=2, input_dim=32)
    x = jax.random.normal(kx, (B, INPUT_DIM), jnp.float32)
    out = jax.block_until_ready(fwd(x, w, b))
    assert out.shape == (B, OUT), out.shape
    ref = x @ w.T + b
    assert jnp.allclose(out, ref, atol=1e-5, rtol=1e-5), (
        float(jnp.max(jnp.abs(out - ref))))

    # ragged-M case (M=20 -> tm=16, grid=2, masked final block): exercises the
    # no-pad path and the >=2-grid-step split used for v7x's two TensorCores.
    x_big = jax.random.normal(kx2, (20, INPUT_DIM), jnp.float32)
    out_big = jax.block_until_ready(fwd(x_big, w, b))
    ref_big = x_big @ w.T + b
    assert jnp.allclose(out_big, ref_big, atol=1e-5, rtol=1e-5), (
        float(jnp.max(jnp.abs(out_big - ref_big))))

    print("KERNEL_OK")
</pallas_src>

<mosaic_0001>
module attributes {stable_mosaic.version = 11 : i64} {
  func.func @_fc_kernel(%arg0: i32, %arg1: memref<2x32xf32, #tpu.memory_space<vmem>>, %arg2: memref<3x32xf32, #tpu.memory_space<vmem>>, %arg3: memref<1x3xf32, #tpu.memory_space<vmem>>, %arg4: memref<2x3xf32, #tpu.memory_space<vmem>>) attributes {dimension_semantics = [#tpu.dimension_semantics<parallel>], iteration_bounds = array<i64: 1>, scalar_prefetch = 0 : i64, scratch_operands = 0 : i64, tpu.core_type = #tpu.core_type<tc>, window_params = [{transform_indices = @transform_0, window_bounds = array<i64: 2, 32>}, {pipeline_mode = #tpu.pipeline_mode<synchronous>, transform_indices = @transform_1, window_bounds = array<i64: 3, 32>}, {pipeline_mode = #tpu.pipeline_mode<synchronous>, transform_indices = @transform_2, window_bounds = array<i64: 1, 3>}, {transform_indices = @transform_3, window_bounds = array<i64: 2, 3>}]} {
    %c0 = arith.constant 0 : index
    %c0_0 = arith.constant 0 : index
    %0 = vector.load %arg1[%c0, %c0_0] : memref<2x32xf32, #tpu.memory_space<vmem>>, vector<2x32xf32>
    %c0_1 = arith.constant 0 : index
    %c0_2 = arith.constant 0 : index
    %1 = vector.load %arg2[%c0_1, %c0_2] : memref<3x32xf32, #tpu.memory_space<vmem>>, vector<3x32xf32>
    %cst = arith.constant dense<0.000000e+00> : vector<2x3xf32>
    %2 = tpu.matmul %0, %1, %cst {dimension_numbers = #tpu.dot_dimension_numbers<[1], [1], [0], [0], [0, 0, 1, 0], [], []>} : vector<2x32xf32>, vector<3x32xf32>, vector<2x3xf32> -> vector<2x3xf32>
    %c0_3 = arith.constant 0 : index
    %c0_4 = arith.constant 0 : index
    %3 = vector.load %arg3[%c0_3, %c0_4] : memref<1x3xf32, #tpu.memory_space<vmem>>, vector<1x3xf32>
    %4 = vector.broadcast %3 : vector<1x3xf32> to vector<2x3xf32>
    %5 = arith.addf %2, %4 : vector<2x3xf32>
    %c0_5 = arith.constant 0 : index
    %c0_6 = arith.constant 0 : index
    %6 = vector.load %arg4[%c0_5, %c0_6] : memref<2x3xf32, #tpu.memory_space<vmem>>, vector<2x3xf32>
    tpu.vector_store %arg4[%c0_5, %c0_6], %5 {strides = array<i32>} : memref<2x3xf32, #tpu.memory_space<vmem>>, vector<2x3xf32>,
    return
  }
  func.func @transform_0(%arg0: i32) -> (i32, i32) {
    %c0_i32 = arith.constant 0 : i32
    %c0_i32_0 = arith.constant 0 : i32
    return %arg0, %c0_i32 : i32, i32
  }
  func.func @transform_1(%arg0: i32) -> (i32, i32) {
    %c0_i32 = arith.constant 0 : i32
    %c0_i32_0 = arith.constant 0 : i32
    %c0_i32_1 = arith.constant 0 : i32
    return %c0_i32, %c0_i32_0 : i32, i32
  }
  func.func @transform_2(%arg0: i32) -> (i32, i32) {
    %c0_i32 = arith.constant 0 : i32
    %c0_i32_0 = arith.constant 0 : i32
    %c0_i32_1 = arith.constant 0 : i32
    return %c0_i32, %c0_i32_0 : i32, i32
  }
  func.func @transform_3(%arg0: i32) -> (i32, i32) {
    %c0_i32 = arith.constant 0 : i32
    %c0_i32_0 = arith.constant 0 : i32
    return %arg0, %c0_i32 : i32, i32
  }
}

</mosaic_0001>

<llo_original>
// kernel: fc_forward.1
$region0: #{fc_forward.1}
  #allocation0 [shape = 'u32[]', space=smem, size = 0x4, offset = 0x4, fixed_abs, tag = 'smem constant byte address 0x4 - core index']
  #allocation1 [shape = 'u32[72,128]{1,0:T(1,128)}', space=vmem, size = 0x9000, scoped, tag = 'internal scratch']
  %s0 = inlined_call_operand.hbm [shape: f32[2,32], index: 0, kind: input, shape index: {}]
  %s1 = inlined_call_operand.hbm [shape: f32[3,32], index: 1, kind: input, shape index: {}]
  %s2 = inlined_call_operand.vmem [shape: f32[1,3], index: 2, kind: input, shape index: {}]
  %s3 = inlined_call_operand.hbm [shape: f32[2,3], index: 3, kind: output, shape index: {}]
  %s4 = sld [smem:[#allocation0]]
  $region30: #{fc_forward.1} parent=0
    _
  %s6 = ssub.s32 1, %s4
  %s7 = scalar_select 0, %s6, %s4
  $region1: #{fc_forward.1} parent=0
    #allocation2 [shape = 'u8[1024]{0}', space=vmem, size = 0x400, scoped, tag = 'input window, operand 0, single buffered']
    #allocation3 [shape = 's32[1]{0}', space=sflag, size = 0x4, scoped, tag = 'scoped memory for fc_forward.1']
    #allocation4 [shape = 's32[1]{0}', space=sflag, size = 0x4, scoped, tag = 'scoped memory for fc_forward.1']
    #allocation5 [shape = 'u8[2048]{0}', space=vmem, size = 0x800, scoped, tag = 'input window, operand 1, single buffered']
    #allocation6 [shape = 's32[1]{0}', space=sflag, size = 0x4, scoped, tag = 'scoped memory for fc_forward.1']
    #allocation7 [shape = 'u8[1024]{0}', space=vmem, size = 0x400, scoped, tag = 'output window, operand 0, single buffered']
    %8 = vsyncpa [#allocation3], 0
    %9 = vsyncpa [#allocation6], 0
    %10 = vsyncpa [#allocation4], 0
    // Predicated region
    $region2: #{fc_forward.1} parent=1 // pred_check
      _
    $region3: #{fc_forward.1} parent=1 // pred_check_branch
      %12 = sbr.rel (0) target = $region5
    $region4: #{fc_forward.1} parent=1 // pred_region
      %14 = vsyncadd [#allocation3], 0
      %s16 = sshll.u32 %s0, 4
      %s17 = int_to_ptr.hbm [resolvable:$true] %s16
      %s18 = sshll.u32 [#allocation2], 4
      %s19 = int_to_ptr.vmem [resolvable:$true] %s18
      %21 = dma.hbm_to_vmem [thread:$0]  %s17, 32, %s19, [#allocation3]
    $region5: #{fc_forward.1} parent=1 // pred_fallthru
      _
    // Predicated region
    $region6: #{fc_forward.1} parent=1 // pred_check
      _
    $region7: #{fc_forward.1} parent=1 // pred_check_branch
      %23 = sbr.rel (0) target = $region9
    $region8: #{fc_forward.1} parent=1 // pred_region
      %25 = vsyncadd [#allocation6], 0
      %s27 = sshll.u32 %s1, 4
      %s28 = int_to_ptr.hbm [resolvable:$true] %s27
      %s29 = sshll.u32 [#allocation5], 4
      %s30 = int_to_ptr.vmem [resolvable:$true] %s29
      %32 = dma.hbm_to_vmem [thread:$0]  %s28, 64, %s30, [#allocation6]
    $region9: #{fc_forward.1} parent=1 // pred_fallthru
      _
    // Predicated region
    $region10: #{fc_forward.1} parent=1 // pred_check
      _
    $region11: #{fc_forward.1} parent=1 // pred_check_branch
      %34 = sbr.rel (0) target = $region13
    $region12: #{fc_forward.1} parent=1 // pred_region
      _
    $region13: #{fc_forward.1} parent=1 // pred_fallthru
      _
    // Predicated region
    $region14: #{fc_forward.1} parent=1 // pred_check
      _
    $region15: #{fc_forward.1} parent=1 // pred_check_branch
      %36 = sbr.rel (0) target = $region17
    $region16: #{fc_forward.1} parent=1 // pred_region
      %38 = dma.done [#allocation3], 32
    $region17: #{fc_forward.1} parent=1 // pred_fallthru
      _
    // Predicated region
    $region18: #{fc_forward.1} parent=1 // pred_check
      _
    $region19: #{fc_forward.1} parent=1 // pred_check_branch
      %40 = sbr.rel (0) target = $region21
    $region20: #{fc_forward.1} parent=1 // pred_region
      %42 = dma.done [#allocation6], 64
    $region21: #{fc_forward.1} parent=1 // pred_fallthru
      _
    %v43 = vld [vmem:[#allocation2] sm:$0x3]
    %v44 = vld [vmem:[#allocation5] sm:$0x7]
    %v45 = vld [vmem:[%s2] sm:$0x1]
    %v47 = vperm.slane %v45, 0
    %vm49 = vcmask 261120
    %v51 = vsel %vm49, %v43, 0
    %v54 = vsel %vm49, %v44, 0
    %56 = vmatpush.xpose.msra.mxu0 0.0
    %57 = vmatpush.xpose.msra.mxu0 0.0
    %58 = vmatpush.xpose.msra.mxu0 0.0
    %59 = vmatpush.xpose.msra.mxu0 0.0
    %60 = vmatpush.xpose.msra.mxu0 0.0
    %61 = vmatpush.xpose.msra.mxu0 0.0
    %62 = vmatpush.xpose.msra.mxu0 0.0
    %63 = vmatpush.xpose.msra.mxu0 0.0
    %64 = vmatpush.xpose.msra.mxu0 0.0
    %65 = vmatpush.xpose.msra.mxu0 0.0
    %66 = vmatpush.xpose.msra.mxu0 0.0
    %67 = vmatpush.xpose.msra.mxu0 0.0
    %68 = vmatpush.xpose.msra.mxu0 0.0
    %69 = vmatpush.xpose.msra.mxu0 0.0
    %70 = vmatpush.xpose.msra.mxu0 0.0
    %71 = vmatpush.xpose.msra.mxu0 %v54
    %72 = vmatmul.f32.gmra.mxu0 %v51
    %v73 = vpop.f32.mrf.mxu0
    %v74 = vadd.f32 %v47, %v73
    %75 = vdwg.mxu0
    %vm76 = vcmask 17408
    %77 = vst.msk [vmem:[#allocation7] sm:$0x3] %vm76, %v74
    // Predicated region
    $region22: #{fc_forward.1} parent=1 // pred_check
      _
    $region23: #{fc_forward.1} parent=1 // pred_check_branch
      %79 = sbr.rel (0) target = $region25
    $region24: #{fc_forward.1} parent=1 // pred_region
      %81 = vsyncadd [#allocation4], 0
      %s83 = sshll.u32 [#allocation7], 4
      %s84 = int_to_ptr.vmem [resolvable:$true] %s83
      %s85 = sshll.u32 %s3, 4
      %s86 = int_to_ptr.hbm [resolvable:$true] %s85
      %88 = dma.vmem_to_hbm [thread:$0]  %s84, 32, %s86, [#allocation4]
    $region25: #{fc_forward.1} parent=1 // pred_fallthru
      _
    // Predicated region
    $region26: #{fc_forward.1} parent=1 // pred_check
      _
    $region27: #{fc_forward.1} parent=1 // pred_check_branch
      %90 = sbr.rel (0) target = $region29
    $region28: #{fc_forward.1} parent=1 // pred_region
      %92 = dma.done [#allocation4], 32
    $region29: #{fc_forward.1} parent=1 // pred_fallthru
      _
    %93 = vsyncpa [#allocation3], 1
    %94 = vsyncpa [#allocation6], 1
    %95 = vsyncpa [#allocation4], 1

</llo_original>
